<compile_context>
chip_gen: v7x
topology: tpu7x:2x2x1
jax: 0.10.0
libtpu: 0.0.40
codegen_flags: <defaults>
</compile_context>

<pallas_src>
import functools

import jax
import jax.numpy as jnp
from jax import lax
from jax.experimental import pallas as pl
from jax.experimental.pallas import tpu as pltpu


# ----------------------------------------------------------------------------
# In-kernel helper: im2col via lane rotations + precomputed masks.
# ----------------------------------------------------------------------------
def _im2col_3x3(x, masks, W):
    """x: (C, Lb) channel-major, batch+spatially flattened on lanes.
    masks: (9, Lb) f32, per-tap validity (tiled per image).
    Returns (9*C, Lb); tap t=(dy+1)*3+(dx+1) occupies rows [t*C,(t+1)*C).
    Out-of-image taps (including any cross-image wrap from the rotation) are
    zeroed by the masks."""
    Lb = x.shape[1]
    taps = []
    t = 0
    for oy in (-1, 0, 1):
        for ox in (-1, 0, 1):
            s = oy * W + ox
            shifted = x if s == 0 else pltpu.roll(x, shift=(-s) % Lb, axis=1)
            taps.append(shifted * masks[t:t + 1, :])
            t += 1
    return jnp.concatenate(taps, axis=0)


# ----------------------------------------------------------------------------
# Pallas kernel: whole ProjBlock forward for Nb images per grid step.
# ----------------------------------------------------------------------------
def projblock_kernel(x_ref, m_ref, wa_ref, wb_ref, bb_ref, out_ref,
                     *, W, cout, compute_dtype):
    # x_ref: (Cpad, Lb) -- channels padded to 8k, one channel is all-ones
    #                      (bias channel); Lb = Nb*H*W lane-dense.
    # out_ref: (Cout, Lb), lane-dense store.
    x = x_ref[...].astype(compute_dtype)          # (Cpad, Lb)
    masks = m_ref[...].astype(compute_dtype)      # (9, Lb)

    # ---- matmul #1: conv3x3 #1 + identity skip + 1x1 conv + their biases ----
    patches = _im2col_3x3(x, masks, W)            # (9*Cpad, Lb), 8-row aligned taps
    acc = jnp.dot(wa_ref[...], patches, preferred_element_type=jnp.float32)
    h = jnp.maximum(acc[:cout], 0.0)              # ReLU(conv3a)        (Cout, Lb)
    x1 = acc[cout:]                               # cat([x, one_conv])  (Cout, Lb)

    # ---- matmul #2: conv3x3 #2 (Cout->Cout) ----
    patches2 = _im2col_3x3(h.astype(compute_dtype), masks, W)   # (9*Cout, Lb)
    x2 = jnp.dot(wb_ref[...], patches2,
                 preferred_element_type=jnp.float32) + bb_ref[...]

    out_ref[...] = (x1 + x2).astype(out_ref.dtype)


# ----------------------------------------------------------------------------
# Host-side helpers (plain JAX, run under jit; tiny arrays).
# ----------------------------------------------------------------------------
def build_tap_masks(H, W, Nb):
    """(9, Nb*H*W) f32 validity masks for tap (dy, dx), tiled per image."""
    HW = H * W
    pos = jnp.arange(Nb * HW, dtype=jnp.int32) % HW
    row = pos // W
    col = pos % W
    masks = []
    for oy in (-1, 0, 1):
        for ox in (-1, 0, 1):
            ok = ((row + oy >= 0) & (row + oy < H) &
                  (col + ox >= 0) & (col + ox < W))
            masks.append(ok)
    return jnp.stack(masks, axis=0).astype(jnp.float32)


def prepare_weights(w1, b1, w3a, b3a, w3b, b3b, *, compute_dtype=jnp.float32):
    """PyTorch OIHW weights -> kernel layouts.

    wa: (2*Cout, 9*Cpad), column (tap t, channel c) = t*Cpad + c.
        rows [0:Cout]          = 3x3 conv #1 (b3a on centre-tap ones channel)
        rows [Cout:Cout+Cin]   = identity on centre tap (skip path = x)
        rows [Cout+Cin:2*Cout] = 1x1 conv (b1 on centre-tap ones channel)
    wb: (Cout, 9*Cout) 3x3 conv #2 (tap-major).
    bb: (Cout, 1) bias column for conv #2 (lane-broadcast add).
    """
    Cout, Cin = w3a.shape[0], w3a.shape[1]
    Cmid = w1.shape[0]
    assert Cmid == Cout - Cin and Cmid > 0, "ProjBlock requires out_channel > in_channel"
    cpad = -(-(Cin + 1) // 8) * 8              # channels + ones channel, 8-aligned
    M1 = Cout + Cin + Cmid                     # == 2 * Cout

    wa = jnp.zeros((M1, 9 * cpad), jnp.float32)
    w3a_t = jnp.transpose(w3a, (0, 2, 3, 1)).reshape(Cout, 9, Cin)   # [o, t, c]
    wa = wa.at[:Cout].set(
        jnp.pad(w3a_t, ((0, 0), (0, 0), (0, cpad - Cin))).reshape(Cout, 9 * cpad))
    wa = wa.at[:Cout, 4 * cpad + Cin].set(b3a)                        # conv3a bias
    wa = wa.at[Cout + jnp.arange(Cin), 4 * cpad + jnp.arange(Cin)].set(1.0)  # skip
    wa = wa.at[Cout + Cin:, 4 * cpad:4 * cpad + Cin].set(w1[:, :, 0, 0])     # 1x1
    wa = wa.at[Cout + Cin:, 4 * cpad + Cin].set(b1)                   # 1x1 bias

    wb = jnp.transpose(w3b, (0, 2, 3, 1)).reshape(Cout, 9 * Cout)
    bb = b3b.reshape(-1, 1)
    return wa.astype(compute_dtype), wb.astype(compute_dtype), bb.astype(jnp.float32)


# ----------------------------------------------------------------------------
# Wrapper: NCHW in / NCHW out; Nb images per grid step flattened onto lanes.
# ----------------------------------------------------------------------------
@functools.partial(jax.jit, static_argnames=("images_per_step", "compute_dtype"))
def projblock_forward(x_nchw, wa, wb, bb, *, images_per_step=None,
                      compute_dtype=jnp.float32):
    N, Cin, H, W = x_nchw.shape
    Cout = wb.shape[0]
    Cpad = wa.shape[1] // 9
    HW = H * W

    if images_per_step is None:
        # Keep >=2 parallel grid steps when possible (v7x has 2 TensorCores),
        # otherwise put every image on the lane axis of a single step.
        images_per_step = N // 2 if (N % 2 == 0 and N >= 2) else N
    Nb = max(int(images_per_step), 1)
    assert N % Nb == 0, "batch must divide images_per_step"
    steps = N // Nb
    Lb = Nb * HW

    # Channel pad [x | ones (bias channel) | zeros], flatten batch onto lanes.
    x_flat = x_nchw.astype(jnp.float32).reshape(N, Cin, HW)
    pieces = [x_flat, jnp.ones((N, 1, HW), jnp.float32)]
    if Cpad - Cin - 1 > 0:
        pieces.append(jnp.zeros((N, Cpad - Cin - 1, HW), jnp.float32))
    x_pad = jnp.concatenate(pieces, axis=1)                      # (N, Cpad, HW)
    x_steps = (x_pad.reshape(steps, Nb, Cpad, HW)
               .transpose(0, 2, 1, 3)
               .reshape(steps, Cpad, Lb))                        # (steps, Cpad, Nb*HW)

    masks = build_tap_masks(H, W, Nb)                            # (9, Lb) f32

    kernel = functools.partial(projblock_kernel, W=W, cout=Cout,
                               compute_dtype=compute_dtype)

    out = pl.pallas_call(
        kernel,
        out_shape=jax.ShapeDtypeStruct((steps, Cout, Lb), jnp.float32),
        grid_spec=pltpu.PrefetchScalarGridSpec(
            num_scalar_prefetch=0,
            grid=(steps,),
            in_specs=[
                pl.BlockSpec((pl.Squeezed(), Cpad, Lb), lambda b: (b, 0, 0)),
                pl.BlockSpec((9, Lb), lambda b: (0, 0)),
                pl.BlockSpec(wa.shape, lambda b: (0, 0)),
                pl.BlockSpec(wb.shape, lambda b: (0, 0)),
                pl.BlockSpec(bb.shape, lambda b: (0, 0)),
            ],
            out_specs=pl.BlockSpec((pl.Squeezed(), Cout, Lb), lambda b: (b, 0, 0)),
        ),
        compiler_params=pltpu.CompilerParams(
            dimension_semantics=("parallel",)),
    )(x_steps, masks, wa, wb, bb)

    out = (out.reshape(steps, Cout, Nb, HW)
           .transpose(0, 2, 1, 3)
           .reshape(N, Cout, H, W))
    return out


# ----------------------------------------------------------------------------
# Deterministic parameter init + spectral normalization (plain-JAX glue).
# ----------------------------------------------------------------------------
def spectral_normalize(w_oihw, key, n_iter=3):
    """PyTorch-style spectral norm: W / sigma_max(W.view(out, -1))."""
    out_ch = w_oihw.shape[0]
    w_mat = w_oihw.reshape(out_ch, -1)
    u = jax.random.normal(key, (out_ch,), dtype=jnp.float32)
    u = u / (jnp.linalg.norm(u) + 1e-12)
    v = None
    for _ in range(n_iter):
        v = w_mat.T @ u
        v = v / (jnp.linalg.norm(v) + 1e-12)
        u = w_mat @ v
        u = u / (jnp.linalg.norm(u) + 1e-12)
    sigma = u @ (w_mat @ v)
    return w_oihw / sigma


def init_params(key, in_channel, out_channel):
    k = jax.random.split(key, 9)
    cmid = out_channel - in_channel
    w1 = 0.1 * jax.random.normal(k[0], (cmid, in_channel, 1, 1), jnp.float32)
    b1 = 0.1 * jax.random.normal(k[1], (cmid,), jnp.float32)
    w3a = 0.1 * jax.random.normal(k[2], (out_channel, in_channel, 3, 3), jnp.float32)
    b3a = 0.1 * jax.random.normal(k[3], (out_channel,), jnp.float32)
    w3b = 0.1 * jax.random.normal(k[4], (out_channel, out_channel, 3, 3), jnp.float32)
    b3b = 0.1 * jax.random.normal(k[5], (out_channel,), jnp.float32)

    w1 = spectral_normalize(w1, k[6])
    w3a = spectral_normalize(w3a, k[7])
    w3b = spectral_normalize(w3b, k[8])
    return w1, b1, w3a, b3a, w3b, b3b


def reference_nchw(x_nchw, w1, b1, w3a, b3a, w3b, b3b):
    """Pure-JAX NCHW reference mirroring the PyTorch module."""
    dn = ("NCHW", "OIHW", "NCHW")
    one = lax.conv_general_dilated(x_nchw, w1, (1, 1), "VALID",
                                   dimension_numbers=dn) + b1[None, :, None, None]
    x1 = jnp.concatenate([x_nchw, one], axis=1)
    h = lax.conv_general_dilated(x_nchw, w3a, (1, 1), "SAME",
                                 dimension_numbers=dn) + b3a[None, :, None, None]
    h = jnp.maximum(h, 0.0)
    x2 = lax.conv_general_dilated(h, w3b, (1, 1), "SAME",
                                  dimension_numbers=dn) + b3b[None, :, None, None]
    return x1 + x2


if __name__ == "__main__":
    # N=4 -> grid=(2,) "parallel" (both v7x TensorCores busy) with Nb=2 images
    # per step flattened onto the lane axis (Lb = 512 lanes).
    N, Cin, H, W = 4, 4, 16, 16
    Cout = 8

    key = jax.random.PRNGKey(0)
    kx, kp = jax.random.split(key)
    x_nchw = jax.random.normal(kx, (N, Cin, H, W), jnp.float32)

    w1, b1, w3a, b3a, w3b, b3b = init_params(kp, Cin, Cout)
    # On v6e/v7x, pass compute_dtype=jnp.bfloat16 here and below to pre-cast
    # the weight blocks and feed the MXU bf16 operands (f32 accumulation).
    # Kept f32 (recommended on v5e) for a tight reference comparison.
    wa, wb, bb = prepare_weights(w1, b1, w3a, b3a, w3b, b3b,
                                 compute_dtype=jnp.float32)

    out = projblock_forward(x_nchw, wa, wb, bb, compute_dtype=jnp.float32)
    out = jax.block_until_ready(out)

    ref = reference_nchw(x_nchw, w1, b1, w3a, b3a, w3b, b3b)

    assert out.shape == (N, Cout, H, W)
    assert jnp.allclose(out, ref, atol=1e-4, rtol=1e-4), (
        float(jnp.max(jnp.abs(out - ref))))

    print("KERNEL_OK")
</pallas_src>

<mosaic_0001>
module attributes {stable_mosaic.version = 11 : i64} {
  func.func @projblock_kernel(%arg0: i32, %arg1: memref<1x8x512xf32, #tpu.memory_space<vmem>>, %arg2: memref<9x512xf32, #tpu.memory_space<vmem>>, %arg3: memref<16x72xf32, #tpu.memory_space<vmem>>, %arg4: memref<8x72xf32, #tpu.memory_space<vmem>>, %arg5: memref<8x1xf32, #tpu.memory_space<vmem>>, %arg6: memref<1x8x512xf32, #tpu.memory_space<vmem>>) attributes {dimension_semantics = [#tpu.dimension_semantics<parallel>], iteration_bounds = array<i64: 2>, scalar_prefetch = 0 : i64, scratch_operands = 0 : i64, tpu.core_type = #tpu.core_type<tc>, window_params = [{transform_indices = @transform_0, window_bounds = array<i64: 1, 8, 512>}, {pipeline_mode = #tpu.pipeline_mode<synchronous>, transform_indices = @transform_1, window_bounds = array<i64: 9, 512>}, {pipeline_mode = #tpu.pipeline_mode<synchronous>, transform_indices = @transform_2, window_bounds = array<i64: 16, 72>}, {pipeline_mode = #tpu.pipeline_mode<synchronous>, transform_indices = @transform_3, window_bounds = array<i64: 8, 72>}, {pipeline_mode = #tpu.pipeline_mode<synchronous>, transform_indices = @transform_4, window_bounds = array<i64: 8, 1>}, {transform_indices = @transform_5, window_bounds = array<i64: 1, 8, 512>}]} {
    %c0 = arith.constant 0 : index
    %c0_0 = arith.constant 0 : index
    %c0_1 = arith.constant 0 : index
    %0 = vector.load %arg1[%c0, %c0_0, %c0_1] : memref<1x8x512xf32, #tpu.memory_space<vmem>>, vector<1x8x512xf32>
    %1 = vector.shape_cast %0 : vector<1x8x512xf32> to vector<8x512xf32>
    %c0_2 = arith.constant 0 : index
    %c0_3 = arith.constant 0 : index
    %2 = vector.load %arg2[%c0_2, %c0_3] : memref<9x512xf32, #tpu.memory_space<vmem>>, vector<9x512xf32>
    %c17_i32 = arith.constant 17 : i32
    %3 = tpu.dynamic_rotate %1 by %c17_i32 dim 1 : vector<8x512xf32>, i32 -> vector<8x512xf32>
    %4 = vector.extract_strided_slice %2 {offsets = [0, 0], sizes = [1, 512], strides = [1, 1]} : vector<9x512xf32> to vector<1x512xf32>
    %5 = vector.broadcast %4 : vector<1x512xf32> to vector<8x512xf32>
    %6 = arith.mulf %3, %5 : vector<8x512xf32>
    %c16_i32 = arith.constant 16 : i32
    %7 = tpu.dynamic_rotate %1 by %c16_i32 dim 1 : vector<8x512xf32>, i32 -> vector<8x512xf32>
    %8 = vector.extract_strided_slice %2 {offsets = [1, 0], sizes = [1, 512], strides = [1, 1]} : vector<9x512xf32> to vector<1x512xf32>
    %9 = vector.broadcast %8 : vector<1x512xf32> to vector<8x512xf32>
    %10 = arith.mulf %7, %9 : vector<8x512xf32>
    %c15_i32 = arith.constant 15 : i32
    %11 = tpu.dynamic_rotate %1 by %c15_i32 dim 1 : vector<8x512xf32>, i32 -> vector<8x512xf32>
    %12 = vector.extract_strided_slice %2 {offsets = [2, 0], sizes = [1, 512], strides = [1, 1]} : vector<9x512xf32> to vector<1x512xf32>
    %13 = vector.broadcast %12 : vector<1x512xf32> to vector<8x512xf32>
    %14 = arith.mulf %11, %13 : vector<8x512xf32>
    %c1_i32 = arith.constant 1 : i32
    %15 = tpu.dynamic_rotate %1 by %c1_i32 dim 1 : vector<8x512xf32>, i32 -> vector<8x512xf32>
    %16 = vector.extract_strided_slice %2 {offsets = [3, 0], sizes = [1, 512], strides = [1, 1]} : vector<9x512xf32> to vector<1x512xf32>
    %17 = vector.broadcast %16 : vector<1x512xf32> to vector<8x512xf32>
    %18 = arith.mulf %15, %17 : vector<8x512xf32>
    %19 = vector.extract_strided_slice %2 {offsets = [4, 0], sizes = [1, 512], strides = [1, 1]} : vector<9x512xf32> to vector<1x512xf32>
    %20 = vector.broadcast %19 : vector<1x512xf32> to vector<8x512xf32>
    %21 = arith.mulf %1, %20 : vector<8x512xf32>
    %c511_i32 = arith.constant 511 : i32
    %22 = tpu.dynamic_rotate %1 by %c511_i32 dim 1 : vector<8x512xf32>, i32 -> vector<8x512xf32>
    %23 = vector.extract_strided_slice %2 {offsets = [5, 0], sizes = [1, 512], strides = [1, 1]} : vector<9x512xf32> to vector<1x512xf32>
    %24 = vector.broadcast %23 : vector<1x512xf32> to vector<8x512xf32>
    %25 = arith.mulf %22, %24 : vector<8x512xf32>
    %c497_i32 = arith.constant 497 : i32
    %26 = tpu.dynamic_rotate %1 by %c497_i32 dim 1 : vector<8x512xf32>, i32 -> vector<8x512xf32>
    %27 = vector.extract_strided_slice %2 {offsets = [6, 0], sizes = [1, 512], strides = [1, 1]} : vector<9x512xf32> to vector<1x512xf32>
    %28 = vector.broadcast %27 : vector<1x512xf32> to vector<8x512xf32>
    %29 = arith.mulf %26, %28 : vector<8x512xf32>
    %c496_i32 = arith.constant 496 : i32
    %30 = tpu.dynamic_rotate %1 by %c496_i32 dim 1 : vector<8x512xf32>, i32 -> vector<8x512xf32>
    %31 = vector.extract_strided_slice %2 {offsets = [7, 0], sizes = [1, 512], strides = [1, 1]} : vector<9x512xf32> to vector<1x512xf32>
    %32 = vector.broadcast %31 : vector<1x512xf32> to vector<8x512xf32>
    %33 = arith.mulf %30, %32 : vector<8x512xf32>
    %c495_i32 = arith.constant 495 : i32
    %34 = tpu.dynamic_rotate %1 by %c495_i32 dim 1 : vector<8x512xf32>, i32 -> vector<8x512xf32>
    %35 = vector.extract_strided_slice %2 {offsets = [8, 0], sizes = [1, 512], strides = [1, 1]} : vector<9x512xf32> to vector<1x512xf32>
    %36 = vector.broadcast %35 : vector<1x512xf32> to vector<8x512xf32>
    %37 = arith.mulf %34, %36 : vector<8x512xf32>
    %38 = tpu.concatenate %6, %10, %14, %18, %21, %25, %29, %33, %37 in 0 : vector<8x512xf32>, vector<8x512xf32>, vector<8x512xf32>, vector<8x512xf32>, vector<8x512xf32>, vector<8x512xf32>, vector<8x512xf32>, vector<8x512xf32>, vector<8x512xf32> -> vector<72x512xf32>
    %c0_4 = arith.constant 0 : index
    %c0_5 = arith.constant 0 : index
    %39 = vector.load %arg3[%c0_4, %c0_5] : memref<16x72xf32, #tpu.memory_space<vmem>>, vector<16x72xf32>
    %cst = arith.constant dense<0.000000e+00> : vector<16x512xf32>
    %40 = tpu.matmul %39, %38, %cst {dimension_numbers = #tpu.dot_dimension_numbers<[1], [0], [0], [1], [0, 0, 1, 1], [], []>} : vector<16x72xf32>, vector<72x512xf32>, vector<16x512xf32> -> vector<16x512xf32>
    %41 = vector.extract_strided_slice %40 {offsets = [0, 0], sizes = [8, 512], strides = [1, 1]} : vector<16x512xf32> to vector<8x512xf32>
    %cst_6 = arith.constant 0.000000e+00 : f32
    %42 = vector.broadcast %cst_6 : f32 to vector<8x512xf32>
    %43 = arith.maximumf %41, %42 : vector<8x512xf32>
    %44 = vector.extract_strided_slice %40 {offsets = [8, 0], sizes = [8, 512], strides = [1, 1]} : vector<16x512xf32> to vector<8x512xf32>
    %c17_i32_7 = arith.constant 17 : i32
    %45 = tpu.dynamic_rotate %43 by %c17_i32_7 dim 1 : vector<8x512xf32>, i32 -> vector<8x512xf32>
    %46 = vector.extract_strided_slice %2 {offsets = [0, 0], sizes = [1, 512], strides = [1, 1]} : vector<9x512xf32> to vector<1x512xf32>
    %47 = vector.broadcast %46 : vector<1x512xf32> to vector<8x512xf32>
    %48 = arith.mulf %45, %47 : vector<8x512xf32>
    %c16_i32_8 = arith.constant 16 : i32
    %49 = tpu.dynamic_rotate %43 by %c16_i32_8 dim 1 : vector<8x512xf32>, i32 -> vector<8x512xf32>
    %50 = vector.extract_strided_slice %2 {offsets = [1, 0], sizes = [1, 512], strides = [1, 1]} : vector<9x512xf32> to vector<1x512xf32>
    %51 = vector.broadcast %50 : vector<1x512xf32> to vector<8x512xf32>
    %52 = arith.mulf %49, %51 : vector<8x512xf32>
    %c15_i32_9 = arith.constant 15 : i32
    %53 = tpu.dynamic_rotate %43 by %c15_i32_9 dim 1 : vector<8x512xf32>, i32 -> vector<8x512xf32>
    %54 = vector.extract_strided_slice %2 {offsets = [2, 0], sizes = [1, 512], strides = [1, 1]} : vector<9x512xf32> to vector<1x512xf32>
    %55 = vector.broadcast %54 : vector<1x512xf32> to vector<8x512xf32>
    %56 = arith.mulf %53, %55 : vector<8x512xf32>
    %c1_i32_10 = arith.constant 1 : i32
    %57 = tpu.dynamic_rotate %43 by %c1_i32_10 dim 1 : vector<8x512xf32>, i32 -> vector<8x512xf32>
    %58 = vector.extract_strided_slice %2 {offsets = [3, 0], sizes = [1, 512], strides = [1, 1]} : vector<9x512xf32> to vector<1x512xf32>
    %59 = vector.broadcast %58 : vector<1x512xf32> to vector<8x512xf32>
    %60 = arith.mulf %57, %59 : vector<8x512xf32>
    %61 = vector.extract_strided_slice %2 {offsets = [4, 0], sizes = [1, 512], strides = [1, 1]} : vector<9x512xf32> to vector<1x512xf32>
    %62 = vector.broadcast %61 : vector<1x512xf32> to vector<8x512xf32>
    %63 = arith.mulf %43, %62 : vector<8x512xf32>
    %c511_i32_11 = arith.constant 511 : i32
    %64 = tpu.dynamic_rotate %43 by %c511_i32_11 dim 1 : vector<8x512xf32>, i32 -> vector<8x512xf32>
    %65 = vector.extract_strided_slice %2 {offsets = [5, 0], sizes = [1, 512], strides = [1, 1]} : vector<9x512xf32> to vector<1x512xf32>
    %66 = vector.broadcast %65 : vector<1x512xf32> to vector<8x512xf32>
    %67 = arith.mulf %64, %66 : vector<8x512xf32>
    %c497_i32_12 = arith.constant 497 : i32
    %68 = tpu.dynamic_rotate %43 by %c497_i32_12 dim 1 : vector<8x512xf32>, i32 -> vector<8x512xf32>
    %69 = vector.extract_strided_slice %2 {offsets = [6, 0], sizes = [1, 512], strides = [1, 1]} : vector<9x512xf32> to vector<1x512xf32>
    %70 = vector.broadcast %69 : vector<1x512xf32> to vector<8x512xf32>
    %71 = arith.mulf %68, %70 : vector<8x512xf32>
    %c496_i32_13 = arith.constant 496 : i32
    %72 = tpu.dynamic_rotate %43 by %c496_i32_13 dim 1 : vector<8x512xf32>, i32 -> vector<8x512xf32>
    %73 = vector.extract_strided_slice %2 {offsets = [7, 0], sizes = [1, 512], strides = [1, 1]} : vector<9x512xf32> to vector<1x512xf32>
    %74 = vector.broadcast %73 : vector<1x512xf32> to vector<8x512xf32>
    %75 = arith.mulf %72, %74 : vector<8x512xf32>
    %c495_i32_14 = arith.constant 495 : i32
    %76 = tpu.dynamic_rotate %43 by %c495_i32_14 dim 1 : vector<8x512xf32>, i32 -> vector<8x512xf32>
    %77 = vector.extract_strided_slice %2 {offsets = [8, 0], sizes = [1, 512], strides = [1, 1]} : vector<9x512xf32> to vector<1x512xf32>
    %78 = vector.broadcast %77 : vector<1x512xf32> to vector<8x512xf32>
    %79 = arith.mulf %76, %78 : vector<8x512xf32>
    %80 = tpu.concatenate %48, %52, %56, %60, %63, %67, %71, %75, %79 in 0 : vector<8x512xf32>, vector<8x512xf32>, vector<8x512xf32>, vector<8x512xf32>, vector<8x512xf32>, vector<8x512xf32>, vector<8x512xf32>, vector<8x512xf32>, vector<8x512xf32> -> vector<72x512xf32>
    %c0_15 = arith.constant 0 : index
    %c0_16 = arith.constant 0 : index
    %81 = vector.load %arg4[%c0_15, %c0_16] : memref<8x72xf32, #tpu.memory_space<vmem>>, vector<8x72xf32>
    %cst_17 = arith.constant dense<0.000000e+00> : vector<8x512xf32>
    %82 = tpu.matmul %81, %80, %cst_17 {dimension_numbers = #tpu.dot_dimension_numbers<[1], [0], [0], [1], [0, 0, 1, 1], [], []>} : vector<8x72xf32>, vector<72x512xf32>, vector<8x512xf32> -> vector<8x512xf32>
    %c0_18 = arith.constant 0 : index
    %c0_19 = arith.constant 0 : index
    %83 = vector.load %arg5[%c0_18, %c0_19] : memref<8x1xf32, #tpu.memory_space<vmem>>, vector<8x1xf32>
    %84 = vector.broadcast %83 : vector<8x1xf32> to vector<8x512xf32>
    %85 = arith.addf %82, %84 : vector<8x512xf32>
    %86 = arith.addf %44, %85 : vector<8x512xf32>
    %c0_20 = arith.constant 0 : index
    %c0_21 = arith.constant 0 : index
    %c0_22 = arith.constant 0 : index
    %87 = vector.load %arg6[%c0_20, %c0_21, %c0_22] : memref<1x8x512xf32, #tpu.memory_space<vmem>>, vector<1x8x512xf32>
    %88 = vector.shape_cast %87 : vector<1x8x512xf32> to vector<8x512xf32>
    %89 = vector.shape_cast %86 : vector<8x512xf32> to vector<1x8x512xf32>
    tpu.vector_store %arg6[%c0_20, %c0_21, %c0_22], %89 {strides = array<i32>} : memref<1x8x512xf32, #tpu.memory_space<vmem>>, vector<1x8x512xf32>,
    return
  }
  func.func @transform_0(%arg0: i32) -> (i32, i32, i32) {
    %c0_i32 = arith.constant 0 : i32
    %c0_i32_0 = arith.constant 0 : i32
    %c0_i32_1 = arith.constant 0 : i32
    return %arg0, %c0_i32, %c0_i32_0 : i32, i32, i32
  }
  func.func @transform_1(%arg0: i32) -> (i32, i32) {
    %c0_i32 = arith.constant 0 : i32
    %c0_i32_0 = arith.constant 0 : i32
    %c0_i32_1 = arith.constant 0 : i32
    return %c0_i32, %c0_i32_0 : i32, i32
  }
  func.func @transform_2(%arg0: i32) -> (i32, i32) {
    %c0_i32 = arith.constant 0 : i32
    %c0_i32_0 = arith.constant 0 : i32
    %c0_i32_1 = arith.constant 0 : i32
    return %c0_i32, %c0_i32_0 : i32, i32
  }
  func.func @transform_3(%arg0: i32) -> (i32, i32) {
    %c0_i32 = arith.constant 0 : i32
    %c0_i32_0 = arith.constant 0 : i32
    %c0_i32_1 = arith.constant 0 : i32
    return %c0_i32, %c0_i32_0 : i32, i32
  }
  func.func @transform_4(%arg0: i32) -> (i32, i32) {
    %c0_i32 = arith.constant 0 : i32
    %c0_i32_0 = arith.constant 0 : i32
    %c0_i32_1 = arith.constant 0 : i32
    return %c0_i32, %c0_i32_0 : i32, i32
  }
  func.func @transform_5(%arg0: i32) -> (i32, i32, i32) {
    %c0_i32 = arith.constant 0 : i32
    %c0_i32_0 = arith.constant 0 : i32
    %c0_i32_1 = arith.constant 0 : i32
    return %arg0, %c0_i32, %c0_i32_0 : i32, i32, i32
  }
}

</mosaic_0001>

<llo_original>
// kernel: projblock_forward.1
$region0: #{projblock_forward.1}
  #allocation0 [shape = 'u32[]', space=smem, size = 0x4, offset = 0x4, fixed_abs, tag = 'smem constant byte address 0x4 - core index']
  #allocation1 [shape = 'u32[144,128]{1,0:T(1,128)}', space=vmem, size = 0x12000, scoped, tag = 'internal scratch']
  %s0 = inlined_call_operand.vmem [shape: f32[2,8,512], index: 0, kind: input, shape index: {}]
  %s1 = inlined_call_operand.vmem [shape: f32[9,512], index: 1, kind: input, shape index: {}]
  %s2 = inlined_call_operand.vmem [shape: f32[16,72], index: 2, kind: input, shape index: {}]
  %s3 = inlined_call_operand.vmem [shape: f32[8,72], index: 3, kind: input, shape index: {}]
  %s4 = inlined_call_operand.vmem [shape: f32[8,1], index: 4, kind: input, shape index: {}]
  %s5 = inlined_call_operand.vmem [shape: f32[2,8,512], index: 5, kind: output, shape index: {}]
  %s6 = sld [smem:[#allocation0]]
  $region53: #{projblock_forward.1} parent=0
    _
  %s8 = ssub.s32 1, %s6
  %s9 = scalar_select 0, %s8, %s6
  loop: start=0, step=1, limit=4
  $region2: #{projblock_forward.1} parent=0 // loop_pre_header
    _
  $region3: #{projblock_forward.1} parent=0 // loop_header
    %s11 = sphi 0, %s15
    %p12 = scmp.ge.s32.totalorder %s11, 4
    %s21 = sphi 0, %s23
    %s24 = sphi 0, %s21
    %s25 = sphi 0, %s24
    %s41 = sphi 0, %s25
    %s45 = sphi 0, %s45
    %s47 = sphi 0, %s45
    %s48 = sphi 0, %s47
    %s62 = sphi 0, %s48
    %s66 = sphi 0, %s66
    %s68 = sphi 0, %s66
    %s69 = sphi 0, %s68
    %s83 = sphi 0, %s69
    %s87 = sphi 0, %s87
    %s89 = sphi 0, %s87
    %s90 = sphi 0, %s89
    %s104 = sphi 0, %s90
    %s108 = sphi 0, %s108
    %s110 = sphi 0, %s108
    %s111 = sphi 0, %s110
    %s125 = sphi 0, %s111
    %s131 = sphi 0, %s133
    %s134 = sphi 0, %s131
    %s135 = sphi 0, %s134
    %s151 = sphi 0, %s135
  $region4: #{projblock_forward.1} parent=0 // loop_header_branch
    %14 = sbr.rel (%p12) target = $region8
  $region5: #{projblock_forward.1} parent=0 // loop_body
    %s16 = ssub.s32 %s11, 1
    %s17 = ssub.s32 %s11, 2
    %s18 = sadd.s32 %s11, 1
    %s19 = ssub.s32 %s11, %s18
    %p20 = scmp.eq.s32.totalorder %s19, 0
    %s22 = sadd.s32 %s21, 1
    %s23 = scalar_select %p20, %s21, %s22
    %p26 = pneg %p20
    %p27 = scmp.eq.s32.totalorder %s11, 1
    %p28 = por %p26, %p27
    %p29 = scmp.ne.s32.totalorder %s21, %s24
    %p30 = scmp.eq.s32.totalorder %s11, 0
    %p31 = por %p29, %p30
    %p32 = scmp.ne.s32.totalorder %s21, %s24
    %p33 = scmp.eq.s32.totalorder %s16, 1
    %p34 = por %p32, %p33
    %p35 = scmp.ne.s32.totalorder %s24, %s25
    %p36 = scmp.eq.s32.totalorder %s16, 0
    %p37 = por %p35, %p36
    %p38 = scmp.ne.s32.totalorder %s24, %s25
    %p39 = scmp.eq.s32.totalorder %s17, 1
    %p40 = por %p38, %p39
    %p42 = scmp.ne.s32.totalorder %s25, %s41
    %p43 = scmp.eq.s32.totalorder %s17, 0
    %p44 = por %p42, %p43
    %s46 = sadd.s32 %s45, 1
    %p49 = scmp.eq.s32.totalorder %s11, 1
    %p50 = scmp.ne.s32.totalorder %s45, %s47
    %p51 = scmp.eq.s32.totalorder %s11, 0
    %p52 = por %p50, %p51
    %p53 = scmp.ne.s32.totalorder %s45, %s47
    %p54 = scmp.eq.s32.totalorder %s16, 1
    %p55 = por %p53, %p54
    %p56 = scmp.ne.s32.totalorder %s47, %s48
    %p57 = scmp.eq.s32.totalorder %s16, 0
    %p58 = por %p56, %p57
    %p59 = scmp.ne.s32.totalorder %s47, %s48
    %p60 = scmp.eq.s32.totalorder %s17, 1
    %p61 = por %p59, %p60
    %p63 = scmp.ne.s32.totalorder %s48, %s62
    %p64 = scmp.eq.s32.totalorder %s17, 0
    %p65 = por %p63, %p64
    %s67 = sadd.s32 %s66, 1
    %p70 = scmp.eq.s32.totalorder %s11, 1
    %p71 = scmp.ne.s32.totalorder %s66, %s68
    %p72 = scmp.eq.s32.totalorder %s11, 0
    %p73 = por %p71, %p72
    %p74 = scmp.ne.s32.totalorder %s66, %s68
    %p75 = scmp.eq.s32.totalorder %s16, 1
    %p76 = por %p74, %p75
    %p77 = scmp.ne.s32.totalorder %s68, %s69
    %p78 = scmp.eq.s32.totalorder %s16, 0
    %p79 = por %p77, %p78
    %p80 = scmp.ne.s32.totalorder %s68, %s69
    %p81 = scmp.eq.s32.totalorder %s17, 1
    %p82 = por %p80, %p81
    %p84 = scmp.ne.s32.totalorder %s69, %s83
    %p85 = scmp.eq.s32.totalorder %s17, 0
    %p86 = por %p84, %p85
    %s88 = sadd.s32 %s87, 1
    %p91 = scmp.eq.s32.totalorder %s11, 1
    %p92 = scmp.ne.s32.totalorder %s87, %s89
    %p93 = scmp.eq.s32.totalorder %s11, 0
    %p94 = por %p92, %p93
    %p95 = scmp.ne.s32.totalorder %s87, %s89
    %p96 = scmp.eq.s32.totalorder %s16, 1
    %p97 = por %p95, %p96
    %p98 = scmp.ne.s32.totalorder %s89, %s90
    %p99 = scmp.eq.s32.totalorder %s16, 0
    %p100 = por %p98, %p99
    %p101 = scmp.ne.s32.totalorder %s89, %s90
    %p102 = scmp.eq.s32.totalorder %s17, 1
    %p103 = por %p101, %p102
    %p105 = scmp.ne.s32.totalorder %s90, %s104
    %p106 = scmp.eq.s32.totalorder %s17, 0
    %p107 = por %p105, %p106
    %s109 = sadd.s32 %s108, 1
    %p112 = scmp.eq.s32.totalorder %s11, 1
    %p113 = scmp.ne.s32.totalorder %s108, %s110
    %p114 = scmp.eq.s32.totalorder %s11, 0
    %p115 = por %p113, %p114
    %p116 = scmp.ne.s32.totalorder %s108, %s110
    %p117 = scmp.eq.s32.totalorder %s16, 1
    %p118 = por %p116, %p117
    %p119 = scmp.ne.s32.totalorder %s110, %s111
    %p120 = scmp.eq.s32.totalorder %s16, 0
    %p121 = por %p119, %p120
    %p122 = scmp.ne.s32.totalorder %s110, %s111
    %p123 = scmp.eq.s32.totalorder %s17, 1
    %p124 = por %p122, %p123
    %p126 = scmp.ne.s32.totalorder %s111, %s125
    %p127 = scmp.eq.s32.totalorder %s17, 0
    %p128 = por %p126, %p127
    %s129 = ssub.s32 %s11, %s18
    %p130 = scmp.eq.s32.totalorder %s129, 0
    %s132 = sadd.s32 %s131, 1
    %s133 = scalar_select %p130, %s131, %s132
    %p136 = pneg %p130
    %p137 = scmp.eq.s32.totalorder %s11, 1
    %p138 = por %p136, %p137
    %p139 = scmp.ne.s32.totalorder %s131, %s134
    %p140 = scmp.eq.s32.totalorder %s11, 0
    %p141 = por %p139, %p140
    %p142 = scmp.ne.s32.totalorder %s131, %s134
    %p143 = scmp.eq.s32.totalorder %s16, 1
    %p144 = por %p142, %p143
    %p145 = scmp.ne.s32.totalorder %s134, %s135
    %p146 = scmp.eq.s32.totalorder %s16, 0
    %p147 = por %p145, %p146
    %p148 = scmp.ne.s32.totalorder %s134, %s135
    %p149 = scmp.eq.s32.totalorder %s17, 1
    %p150 = por %p148, %p149
    %p152 = scmp.ne.s32.totalorder %s135, %s151
    %p153 = scmp.eq.s32.totalorder %s17, 0
    %p154 = por %p152, %p153
    %p155 = scmp.le.s32.totalorder 1, %s11
    %p156 = scmp.lt.s32.totalorder %s11, 3
    %p157 = pnand %p155, %p156
    %p158 = pneg %p157
    // Predicated region
    $region9: #{projblock_forward.1} parent=5 // pred_check
      _
    $region10: #{projblock_forward.1} parent=5 // pred_check_branch
      %160 = sbr.rel (%p157) target = $region12
    $region11: #{projblock_forward.1} parent=5 // pred_region
      %s161 = ssub.s32 %s11, 1
      // Predicated region
      $region13: #{projblock_forward.1} parent=11 // pred_check
        %p162 = pneg %p58
      $region14: #{projblock_forward.1} parent=11 // pred_check_branch
        %164 = sbr.rel (%p162) target = $region16
      $region15: #{projblock_forward.1} parent=11 // pred_region
        _
      $region16: #{projblock_forward.1} parent=11 // pred_fallthru
        _
      // Predicated region
      $region17: #{projblock_forward.1} parent=11 // pred_check
        %p165 = pneg %p79
      $region18: #{projblock_forward.1} parent=11 // pred_check_branch
        %167 = sbr.rel (%p165) target = $region20
      $region19: #{projblock_forward.1} parent=11 // pred_region
        _
      $region20: #{projblock_forward.1} parent=11 // pred_fallthru
        _
      // Predicated region
      $region21: #{projblock_forward.1} parent=11 // pred_check
        %p168 = pneg %p100
      $region22: #{projblock_forward.1} parent=11 // pred_check_branch
        %170 = sbr.rel (%p168) target = $region24
      $region23: #{projblock_forward.1} parent=11 // pred_region
        _
      $region24: #{projblock_forward.1} parent=11 // pred_fallthru
        _
      // Predicated region
      $region25: #{projblock_forward.1} parent=11 // pred_check
        %p171 = pneg %p121
      $region26: #{projblock_forward.1} parent=11 // pred_check_branch
        %173 = sbr.rel (%p171) target = $region28
      $region27: #{projblock_forward.1} parent=11 // pred_region
        _
      $region28: #{projblock_forward.1} parent=11 // pred_fallthru
        _
    $region12: #{projblock_forward.1} parent=5 // pred_fallthru
      _
    %p174 = scmp.lt.s32.totalorder %s11, 2
    // Predicated region
    $region29: #{projblock_forward.1} parent=5 // pred_check
      %p175 = pneg %p174
    $region30: #{projblock_forward.1} parent=5 // pred_check_branch
      %177 = sbr.rel (%p175) target = $region32
    $region31: #{projblock_forward.1} parent=5 // pred_region
      // Predicated region
      $region33: #{projblock_forward.1} parent=31 // pred_check
        %p178 = pneg %p31
      $region34: #{projblock_forward.1} parent=31 // pred_check_branch
        %180 = sbr.rel (%p178) target = $region36
      $region35: #{projblock_forward.1} parent=31 // pred_region
        %p181 = scmp.lt.s32.totalorder %s11, 1
        %s182 = scalar_select %p181, %s11, 1
        %s183 = smul.addr %s182, 4
        %s184 = smul.addr %s183, 8
        %s185 = scalar_lea.vmem %s0, %s184
      $region36: #{projblock_forward.1} parent=31 // pred_fallthru
        _
    $region32: #{projblock_forward.1} parent=5 // pred_fallthru
      _
    %p186 = scmp.le.s32.totalorder 1, %s11
    %p187 = scmp.lt.s32.totalorder %s11, 3
    %p188 = pnand %p186, %p187
    %p189 = pneg %p188
    // Predicated region
    $region37: #{projblock_forward.1} parent=5 // pred_check
      _
    $region38: #{projblock_forward.1} parent=5 // pred_check_branch
      %191 = sbr.rel (%p188) target = $region40
    $region39: #{projblock_forward.1} parent=5 // pred_region
      %s192 = ssub.s32 %s11, 1
      %p193 = scmp.lt.s32.totalorder %s16, 1
      %s194 = scalar_select %p193, %s16, 1
      %s195 = smul.addr %s194, 4
      %s196 = smul.addr %s195, 8
      %s197 = scalar_lea.vmem %s0, %s196
      %p198 = pneg %p37
      %p199 = pneg %p34
      %p200 = pneg %p58
      %p201 = pneg %p55
      %p202 = pneg %p79
      %p203 = pneg %p76
      %p204 = pneg %p100
      %p205 = pneg %p97
      %p206 = pneg %p121
      %p207 = pneg %p118
      %p208 = pneg %p147
      %p209 = pneg %p144
      %p210 = scmp.lt.s32.totalorder %s16, 1
      %s211 = scalar_select %p210, %s16, 1
      %s212 = smul.addr %s211, 4
      %s213 = smul.addr %s212, 8
      %s214 = scalar_lea.vmem %s5, %s213
      %p215 = scmp.lt.s32.totalorder %s16, 1
      %s216 = scalar_select %p215, %s16, 1
      %s217 = smul.addr %s216, 4
      %s218 = smul.addr %s217, 8
      %s219 = scalar_lea.vmem %s0, %s218
      %p220 = scmp.lt.s32.totalorder %s16, 1
      %s221 = scalar_select %p220, %s16, 1
      %s222 = smul.addr %s221, 4
      %s223 = smul.addr %s222, 8
      %s224 = scalar_lea.vmem %s5, %s223
      %v225 = vld [vmem:[%s219] sm:$0xff]
      %v226 = vld [vmem:[%s219 + $0x8] sm:$0xff]
      %v227 = vld [vmem:[%s219 + $0x10] sm:$0xff]
      %v228 = vld [vmem:[%s219 + $0x18] sm:$0xff]
      %v229 = vld [vmem:[%s1] sm:$0xff]
      %v230 = vld [vmem:[%s1 + $0x8] sm:$0xff]
      %v231 = vld [vmem:[%s1 + $0x10] sm:$0xff]
      %v232 = vld [vmem:[%s1 + $0x18] sm:$0xff]
      %v233 = vld [vmem:[%s1 + $0x20] sm:$0x1]
      %v234 = vld [vmem:[%s1 + $0x28] sm:$0x1]
      %v235 = vld [vmem:[%s1 + $0x30] sm:$0x1]
      %v236 = vld [vmem:[%s1 + $0x38] sm:$0x1]
      %237 = vrot.lane.b32.xlu0 %v225, 17
      %v238 = vpop.permute.xlu0 %237
      %239 = vrot.lane.b32.xlu0 %v226, 17
      %v240 = vpop.permute.xlu0 %239
      %241 = vrot.lane.b32.xlu0 %v227, 17
      %v242 = vpop.permute.xlu0 %241
      %243 = vrot.lane.b32.xlu0 %v228, 17
      %v244 = vpop.permute.xlu0 %243
      %v245 = vlaneseq
      %v246 = vand.u32 %v245, 127
      %vm247 = vcmp.lt.s32.totalorder %v246, 17
      %v248 = vsel %vm247, %v242, %v244
      %v249 = vsel %vm247, %v240, %v242
      %v250 = vsel %vm247, %v238, %v240
      %v251 = vsel %vm247, %v244, %v238
      %v252 = vlaneseq
      %v253 = vshrl.u32 %v252, 7
      %v254 = vsub.s32 0, %v253
      %v255 = vrot.slane %v229, %v254
      %v256 = vlaneseq
      %v257 = vshrl.u32 %v256, 7
      %v258 = vsub.s32 0, %v257
      %v259 = vrot.slane %v230, %v258
      %v260 = vlaneseq
      %v261 = vshrl.u32 %v260, 7
      %v262 = vsub.s32 0, %v261
      %v263 = vrot.slane %v231, %v262
      %v264 = vlaneseq
      %v265 = vshrl.u32 %v264, 7
      %v266 = vsub.s32 0, %v265
      %v267 = vrot.slane %v232, %v266
      %v268 = vmul.f32 %v251, %v255
      %v269 = vmul.f32 %v250, %v259
      %v270 = vmul.f32 %v249, %v263
      %v271 = vmul.f32 %v248, %v267
      %272 = vrot.lane.b32.xlu0 %v225, 16
      %v273 = vpop.permute.xlu0 %272
      %274 = vrot.lane.b32.xlu0 %v226, 16
      %v275 = vpop.permute.xlu0 %274
      %276 = vrot.lane.b32.xlu0 %v227, 16
      %v277 = vpop.permute.xlu0 %276
      %278 = vrot.lane.b32.xlu0 %v228, 16
      %v279 = vpop.permute.xlu0 %278
      %vm280 = vcmp.lt.s32.totalorder %v246, 16
      %v281 = vsel %vm280, %v277, %v279
      %v282 = vsel %vm280, %v275, %v277
      %v283 = vsel %vm280, %v273, %v275
      %v284 = vsel %vm280, %v279, %v273
      %v285 = vlaneseq
      %v286 = vshrl.u32 %v285, 7
      %v287 = vsub.s32 1, %v286
      %v288 = vrot.slane %v229, %v287
      %v289 = vlaneseq
      %v290 = vshrl.u32 %v289, 7
      %v291 = vsub.s32 1, %v290
      %v292 = vrot.slane %v230, %v291
      %v293 = vlaneseq
      %v294 = vshrl.u32 %v293, 7
      %v295 = vsub.s32 1, %v294
      %v296 = vrot.slane %v231, %v295
      %v297 = vlaneseq
      %v298 = vshrl.u32 %v297, 7
      %v299 = vsub.s32 1, %v298
      %v300 = vrot.slane %v232, %v299
      %v301 = vmul.f32 %v284, %v288
      %v302 = vmul.f32 %v283, %v292
      %v303 = vmul.f32 %v282, %v296
      %v304 = vmul.f32 %v281, %v300
      %305 = vrot.lane.b32.xlu0 %v225, 15
      %v306 = vpop.permute.xlu0 %305
      %307 = vrot.lane.b32.xlu0 %v226, 15
      %v308 = vpop.permute.xlu0 %307
      %309 = vrot.lane.b32.xlu0 %v227, 15
      %v310 = vpop.permute.xlu0 %309
      %311 = vrot.lane.b32.xlu0 %v228, 15
      %v312 = vpop.permute.xlu0 %311
      %vm313 = vcmp.lt.s32.totalorder %v246, 15
      %v314 = vsel %vm313, %v310, %v312
      %v315 = vsel %vm313, %v308, %v310
      %v316 = vsel %vm313, %v306, %v308
      %v317 = vsel %vm313, %v312, %v306
      %v318 = vlaneseq
      %v319 = vshrl.u32 %v318, 7
      %v320 = vsub.s32 2, %v319
      %v321 = vrot.slane %v229, %v320
      %v322 = vlaneseq
      %v323 = vshrl.u32 %v322, 7
      %v324 = vsub.s32 2, %v323
      %v325 = vrot.slane %v230, %v324
      %v326 = vlaneseq
      %v327 = vshrl.u32 %v326, 7
      %v328 = vsub.s32 2, %v327
      %v329 = vrot.slane %v231, %v328
      %v330 = vlaneseq
      %v331 = vshrl.u32 %v330, 7
      %v332 = vsub.s32 2, %v331
      %v333 = vrot.slane %v232, %v332
      %v334 = vmul.f32 %v317, %v321
      %v335 = vmul.f32 %v316, %v325
      %v336 = vmul.f32 %v315, %v329
      %v337 = vmul.f32 %v314, %v333
      %338 = vrot.lane.b32.xlu0 %v225, 1
      %v339 = vpop.permute.xlu0 %338
      %340 = vrot.lane.b32.xlu0 %v226, 1
      %v341 = vpop.permute.xlu0 %340
      %342 = vrot.lane.b32.xlu0 %v227, 1
      %v343 = vpop.permute.xlu0 %342
      %344 = vrot.lane.b32.xlu0 %v228, 1
      %v345 = vpop.permute.xlu0 %344
      %vm346 = vcmp.lt.s32.totalorder %v246, 1
      %v347 = vsel %vm346, %v343, %v345
      %v348 = vsel %vm346, %v341, %v343
      %v349 = vsel %vm346, %v339, %v341
      %v350 = vsel %vm346, %v345, %v339
      %v351 = vlaneseq
      %v352 = vshrl.u32 %v351, 7
      %v353 = vsub.s32 3, %v352
      %v354 = vrot.slane %v229, %v353
      %v355 = vlaneseq
      %v356 = vshrl.u32 %v355, 7
      %v357 = vsub.s32 3, %v356
      %v358 = vrot.slane %v230, %v357
      %v359 = vlaneseq
      %v360 = vshrl.u32 %v359, 7
      %v361 = vsub.s32 3, %v360
      %v362 = vrot.slane %v231, %v361
      %v363 = vlaneseq
      %v364 = vshrl.u32 %v363, 7
      %v365 = vsub.s32 3, %v364
      %v366 = vrot.slane %v232, %v365
      %v367 = vmul.f32 %v350, %v354
      %v368 = vmul.f32 %v349, %v358
      %v369 = vmul.f32 %v348, %v362
      %v370 = vmul.f32 %v347, %v366
      %v371 = vlaneseq
      %v372 = vshrl.u32 %v371, 7
      %v373 = vsub.s32 4, %v372
      %v374 = vrot.slane %v229, %v373
      %v375 = vlaneseq
      %v376 = vshrl.u32 %v375, 7
      %v377 = vsub.s32 4, %v376
      %v378 = vrot.slane %v230, %v377
      %v379 = vlaneseq
      %v380 = vshrl.u32 %v379, 7
      %v381 = vsub.s32 4, %v380
      %v382 = vrot.slane %v231, %v381
      %v383 = vlaneseq
      %v384 = vshrl.u32 %v383, 7
      %v385 = vsub.s32 4, %v384
      %v386 = vrot.slane %v232, %v385
      %v387 = vmul.f32 %v225, %v374
      %v388 = vmul.f32 %v226, %v378
      %v389 = vmul.f32 %v227, %v382
      %v390 = vmul.f32 %v228, %v386
      %391 = vrot.lane.b32.xlu0 %v225, 127
      %v392 = vpop.permute.xlu0 %391
      %393 = vrot.lane.b32.xlu0 %v226, 127
      %v394 = vpop.permute.xlu0 %393
      %395 = vrot.lane.b32.xlu0 %v227, 127
      %v396 = vpop.permute.xlu0 %395
      %397 = vrot.lane.b32.xlu0 %v228, 127
      %v398 = vpop.permute.xlu0 %397
      %vm399 = vcmp.lt.s32.totalorder %v246, 127
      %v400 = vsel %vm399, %v396, %v398
      %v401 = vsel %vm399, %v394, %v396
      %v402 = vsel %vm399, %v392, %v394
      %v403 = vsel %vm399, %v398, %v392
      %v404 = vlaneseq
      %v405 = vshrl.u32 %v404, 7
      %v406 = vsub.s32 5, %v405
      %v407 = vrot.slane %v229, %v406
      %v408 = vlaneseq
      %v409 = vshrl.u32 %v408, 7
      %v410 = vsub.s32 5, %v409
      %v411 = vrot.slane %v230, %v410
      %v412 = vlaneseq
      %v413 = vshrl.u32 %v412, 7
      %v414 = vsub.s32 5, %v413
      %v415 = vrot.slane %v231, %v414
      %v416 = vlaneseq
      %v417 = vshrl.u32 %v416, 7
      %v418 = vsub.s32 5, %v417
      %v419 = vrot.slane %v232, %v418
      %v420 = vmul.f32 %v402, %v407
      %v421 = vmul.f32 %v401, %v411
      %v422 = vmul.f32 %v400, %v415
      %v423 = vmul.f32 %v403, %v419
      %424 = vrot.lane.b32.xlu0 %v225, 113
      %v425 = vpop.permute.xlu0 %424
      %426 = vrot.lane.b32.xlu0 %v226, 113
      %v427 = vpop.permute.xlu0 %426
      %428 = vrot.lane.b32.xlu0 %v227, 113
      %v429 = vpop.permute.xlu0 %428
      %430 = vrot.lane.b32.xlu0 %v228, 113
      %v431 = vpop.permute.xlu0 %430
      %vm432 = vcmp.lt.s32.totalorder %v246, 113
      %v433 = vsel %vm432, %v429, %v431
      %v434 = vsel %vm432, %v427, %v429
      %v435 = vsel %vm432, %v425, %v427
      %v436 = vsel %vm432, %v431, %v425
      %v437 = vlaneseq
      %v438 = vshrl.u32 %v437, 7
      %v439 = vsub.s32 6, %v438
      %v440 = vrot.slane %v229, %v439
      %v441 = vlaneseq
      %v442 = vshrl.u32 %v441, 7
      %v443 = vsub.s32 6, %v442
      %v444 = vrot.slane %v230, %v443
      %v445 = vlaneseq
      %v446 = vshrl.u32 %v445, 7
      %v447 = vsub.s32 6, %v446
      %v448 = vrot.slane %v231, %v447
      %v449 = vlaneseq
      %v450 = vshrl.u32 %v449, 7
      %v451 = vsub.s32 6, %v450
      %v452 = vrot.slane %v232, %v451
      %v453 = vmul.f32 %v435, %v440
      %v454 = vmul.f32 %v434, %v444
      %v455 = vmul.f32 %v433, %v448
      %v456 = vmul.f32 %v436, %v452
      %457 = vrot.lane.b32.xlu0 %v225, 112
      %v458 = vpop.permute.xlu0 %457
      %459 = vrot.lane.b32.xlu0 %v226, 112
      %v460 = vpop.permute.xlu0 %459
      %461 = vrot.lane.b32.xlu0 %v227, 112
      %v462 = vpop.permute.xlu0 %461
      %463 = vrot.lane.b32.xlu0 %v228, 112
      %v464 = vpop.permute.xlu0 %463
      %vm465 = vcmp.lt.s32.totalorder %v246, 112
      %v466 = vsel %vm465, %v462, %v464
      %v467 = vsel %vm465, %v460, %v462
      %v468 = vsel %vm465, %v458, %v460
      %v469 = vsel %vm465, %v464, %v458
      %v470 = vlaneseq
      %v471 = vshrl.u32 %v470, 7
      %v472 = vsub.s32 7, %v471
      %v473 = vrot.slane %v229, %v472
      %v474 = vlaneseq
      %v475 = vshrl.u32 %v474, 7
      %v476 = vsub.s32 7, %v475
      %v477 = vrot.slane %v230, %v476
      %v478 = vlaneseq
      %v479 = vshrl.u32 %v478, 7
      %v480 = vsub.s32 7, %v479
      %v481 = vrot.slane %v231, %v480
      %v482 = vlaneseq
      %v483 = vshrl.u32 %v482, 7
      %v484 = vsub.s32 7, %v483
      %v485 = vrot.slane %v232, %v484
      %v486 = vmul.f32 %v468, %v473
      %v487 = vmul.f32 %v467, %v477
      %v488 = vmul.f32 %v466, %v481
      %v489 = vmul.f32 %v469, %v485
      %490 = vrot.lane.b32.xlu0 %v225, 111
      %v491 = vpop.permute.xlu0 %490
      %492 = vrot.lane.b32.xlu0 %v226, 111
      %v493 = vpop.permute.xlu0 %492
      %494 = vrot.lane.b32.xlu0 %v227, 111
      %v495 = vpop.permute.xlu0 %494
      %496 = vrot.lane.b32.xlu0 %v228, 111
      %v497 = vpop.permute.xlu0 %496
      %vm498 = vcmp.lt.s32.totalorder %v246, 111
      %v499 = vsel %vm498, %v495, %v497
      %v500 = vsel %vm498, %v493, %v495
      %v501 = vsel %vm498, %v491, %v493
      %v502 = vsel %vm498, %v497, %v491
      %v503 = vlaneseq
      %v504 = vshrl.u32 %v503, 7
      %v505 = vsub.s32 0, %v504
      %v506 = vrot.slane %v233, %v505
      %v507 = vlaneseq
      %v508 = vshrl.u32 %v507, 7
      %v509 = vsub.s32 0, %v508
      %v510 = vrot.slane %v234, %v509
      %v511 = vlaneseq
      %v512 = vshrl.u32 %v511, 7
      %v513 = vsub.s32 0, %v512
      %v514 = vrot.slane %v235, %v513
      %v515 = vlaneseq
      %v516 = vshrl.u32 %v515, 7
      %v517 = vsub.s32 0, %v516
      %v518 = vrot.slane %v236, %v517
      %v519 = vmul.f32 %v501, %v506
      %v520 = vmul.f32 %v500, %v510
      %v521 = vmul.f32 %v499, %v514
      %v522 = vmul.f32 %v502, %v518
      %v523 = vld [vmem:[%s2] sm:$0xff]
      %v524 = vld [vmem:[%s2 + $0x8] sm:$0xff]
      %vm525 = vcmask 588800
      %v527 = vsel %vm525, %v523, 0
      %v530 = vsel %vm525, %v524, 0
      %532 = vmatprep.subr.mxu0 %v269
      %533 = vmatpush1.msra.mxu0 %v268
      %534 = vmatprep.subr.mxu0 %v302
      %535 = vmatpush1.msra.mxu0 %v301
      %536 = vmatprep.subr.mxu0 %v335
      %537 = vmatpush1.msra.mxu0 %v334
      %538 = vmatprep.subr.mxu0 %v368
      %539 = vmatpush1.msra.mxu0 %v367
      %540 = vmatprep.subr.mxu0 %v388
      %541 = vmatpush1.msra.mxu0 %v387
      %542 = vmatprep.subr.mxu0 %v421
      %543 = vmatpush1.msra.mxu0 %v420
      %544 = vmatprep.subr.mxu0 %v454
      %545 = vmatpush1.msra.mxu0 %v453
      %546 = vmatprep.subr.mxu0 %v487
      %547 = vmatpush1.msra.mxu0 %v486
      %548 = vmatprep.subr.mxu0 %v520
      %549 = vmatpush1.msra.mxu0 %v519
      %550 = vmatprep.subr.mxu0 0.0
      %551 = vmatpush1.msra.mxu0 0.0
      %552 = vmatprep.subr.mxu0 0.0
      %553 = vmatpush1.msra.mxu0 0.0
      %554 = vmatprep.subr.mxu0 0.0
      %555 = vmatpush1.msra.mxu0 0.0
      %556 = vmatprep.subr.mxu0 0.0
      %557 = vmatpush1.msra.mxu0 0.0
      %558 = vmatprep.subr.mxu0 0.0
      %559 = vmatpush1.msra.mxu0 0.0
      %560 = vmatprep.subr.mxu0 0.0
      %561 = vmatpush1.msra.mxu0 0.0
      %562 = vmatprep.subr.mxu0 0.0
      %563 = vmatpush1.msra.mxu0 0.0
      %564 = vmatprep.subr.mxu0 0.0
      %565 = vmatpush1.msra.mxu0 0.0
      %566 = vmatprep.subr.mxu0 0.0
      %567 = vmatpush1.msra.mxu0 0.0
      %568 = vmatprep.subr.mxu0 0.0
      %569 = vmatpush1.msra.mxu0 0.0
      %570 = vmatprep.subr.mxu0 0.0
      %571 = vmatpush1.msra.mxu0 0.0
      %572 = vmatprep.subr.mxu0 0.0
      %573 = vmatpush1.msra.mxu0 0.0
      %574 = vmatprep.subr.mxu0 0.0
      %575 = vmatpush1.msra.mxu0 0.0
      %576 = vmatprep.subr.mxu0 0.0
      %577 = vmatpush1.msra.mxu0 0.0
      %578 = vmatprep.subr.mxu0 0.0
      %579 = vmatpush1.msra.mxu0 0.0
      %580 = vmatprep.subr.mxu0 0.0
      %581 = vmatpush1.msra.mxu0 0.0
      %582 = vmatprep.subr.mxu0 0.0
      %583 = vmatpush1.msra.mxu0 0.0
      %584 = vmatprep.subr.mxu0 0.0
      %585 = vmatpush1.msra.mxu0 0.0
      %586 = vmatprep.subr.mxu0 0.0
      %587 = vmatpush1.msra.mxu0 0.0
      %588 = vmatprep.subr.mxu0 0.0
      %589 = vmatpush1.msra.mxu0 0.0
      %590 = vmatprep.subr.mxu0 0.0
      %591 = vmatpush1.msra.mxu0 0.0
      %592 = vmatprep.subr.mxu0 0.0
      %593 = vmatpush1.msra.mxu0 0.0
      %594 = vmatprep.subr.mxu0 0.0
      %595 = vmatpush1.msra.mxu0 0.0
      %596 = vmatprep.mubr.f32.mxu0 0.0
      %597 = vmatmul.mubr.f32.gmra.mrb[0].mxu0 %v527
      %v598 = vpop.f32.mrb[0].mxu0
      %v599 = vadd.f32 0.0, %v598
      %v600 = vpop.f32.mrb[0].mxu0
      %v601 = vadd.f32 0.0, %v600
      %602 = vmatprep.mubr.f32.mxu0 0.0
      %603 = vmatmul.mubr.f32.gmra.mrb[0].mxu0 %v530
      %v604 = vpop.f32.mrb[0].mxu0
      %v605 = vadd.f32 0.0, %v604
      %v606 = vpop.f32.mrb[0].mxu0
      %v607 = vadd.f32 0.0, %v606
      %608 = vdwg.mxu0
      %609 = vmatprep.subr.mxu0 %v271
      %610 = vmatpush1.msra.mxu0 %v270
      %611 = vmatprep.subr.mxu0 %v304
      %612 = vmatpush1.msra.mxu0 %v303
      %613 = vmatprep.subr.mxu0 %v337
      %614 = vmatpush1.msra.mxu0 %v336
      %615 = vmatprep.subr.mxu0 %v370
      %616 = vmatpush1.msra.mxu0 %v369
      %617 = vmatprep.subr.mxu0 %v390
      %618 = vmatpush1.msra.mxu0 %v389
      %619 = vmatprep.subr.mxu0 %v423
      %620 = vmatpush1.msra.mxu0 %v422
      %621 = vmatprep.subr.mxu0 %v456
      %622 = vmatpush1.msra.mxu0 %v455
      %623 = vmatprep.subr.mxu0 %v489
      %624 = vmatpush1.msra.mxu0 %v488
      %625 = vmatprep.subr.mxu0 %v522
      %626 = vmatpush1.msra.mxu0 %v521
      %627 = vmatprep.subr.mxu0 0.0
      %628 = vmatpush1.msra.mxu0 0.0
      %629 = vmatprep.subr.mxu0 0.0
      %630 = vmatpush1.msra.mxu0 0.0
      %631 = vmatprep.subr.mxu0 0.0
      %632 = vmatpush1.msra.mxu0 0.0
      %633 = vmatprep.subr.mxu0 0.0
      %634 = vmatpush1.msra.mxu0 0.0
      %635 = vmatprep.subr.mxu0 0.0
      %636 = vmatpush1.msra.mxu0 0.0
      %637 = vmatprep.subr.mxu0 0.0
      %638 = vmatpush1.msra.mxu0 0.0
      %639 = vmatprep.subr.mxu0 0.0
      %640 = vmatpush1.msra.mxu0 0.0
      %641 = vmatprep.subr.mxu0 0.0
      %642 = vmatpush1.msra.mxu0 0.0
      %643 = vmatprep.subr.mxu0 0.0
      %644 = vmatpush1.msra.mxu0 0.0
      %645 = vmatprep.subr.mxu0 0.0
      %646 = vmatpush1.msra.mxu0 0.0
      %647 = vmatprep.subr.mxu0 0.0
      %648 = vmatpush1.msra.mxu0 0.0
      %649 = vmatprep.subr.mxu0 0.0
      %650 = vmatpush1.msra.mxu0 0.0
      %651 = vmatprep.subr.mxu0 0.0
      %652 = vmatpush1.msra.mxu0 0.0
      %653 = vmatprep.subr.mxu0 0.0
      %654 = vmatpush1.msra.mxu0 0.0
      %655 = vmatprep.subr.mxu0 0.0
      %656 = vmatpush1.msra.mxu0 0.0
      %657 = vmatprep.subr.mxu0 0.0
      %658 = vmatpush1.msra.mxu0 0.0
      %659 = vmatprep.subr.mxu0 0.0
      %660 = vmatpush1.msra.mxu0 0.0
      %661 = vmatprep.subr.mxu0 0.0
      %662 = vmatpush1.msra.mxu0 0.0
      %663 = vmatprep.subr.mxu0 0.0
      %664 = vmatpush1.msra.mxu0 0.0
      %665 = vmatprep.subr.mxu0 0.0
      %666 = vmatpush1.msra.mxu0 0.0
      %667 = vmatprep.subr.mxu0 0.0
      %668 = vmatpush1.msra.mxu0 0.0
      %669 = vmatprep.subr.mxu0 0.0
      %670 = vmatpush1.msra.mxu0 0.0
      %671 = vmatprep.subr.mxu0 0.0
      %672 = vmatpush1.msra.mxu0 0.0
      %673 = vmatprep.mubr.f32.mxu0 0.0
      %674 = vmatmul.mubr.f32.gmra.mrb[0].mxu0 %v527
      %v675 = vpop.f32.mrb[0].mxu0
      %v676 = vadd.f32 0.0, %v675
      %v677 = vpop.f32.mrb[0].mxu0
      %v678 = vadd.f32 0.0, %v677
      %679 = vmatprep.mubr.f32.mxu0 0.0
      %680 = vmatmul.mubr.f32.gmra.mrb[0].mxu0 %v530
      %v681 = vpop.f32.mrb[0].mxu0
      %v682 = vadd.f32 0.0, %v681
      %v683 = vpop.f32.mrb[0].mxu0
      %v684 = vadd.f32 0.0, %v683
      %685 = vdwg.mxu0
      %v686 = vmax.f32 %v599, 0.0
      %v687 = vmax.f32 %v601, 0.0
      %v688 = vmax.f32 %v676, 0.0
      %v689 = vmax.f32 %v678, 0.0
      %690 = vrot.lane.b32.xlu0 %v686, 17
      %v691 = vpop.permute.xlu0 %690
      %692 = vrot.lane.b32.xlu0 %v687, 17
      %v693 = vpop.permute.xlu0 %692
      %694 = vrot.lane.b32.xlu0 %v688, 17
      %v695 = vpop.permute.xlu0 %694
      %696 = vrot.lane.b32.xlu0 %v689, 17
      %v697 = vpop.permute.xlu0 %696
      %v698 = vsel %vm247, %v695, %v697
      %v699 = vsel %vm247, %v693, %v695
      %v700 = vsel %vm247, %v691, %v693
      %v701 = vsel %vm247, %v697, %v691
      %v702 = vmul.f32 %v701, %v255
      %v703 = vmul.f32 %v700, %v259
      %v704 = vmul.f32 %v699, %v263
      %v705 = vmul.f32 %v698, %v267
      %706 = vrot.lane.b32.xlu0 %v686, 16
      %v707 = vpop.permute.xlu0 %706
      %708 = vrot.lane.b32.xlu0 %v687, 16
      %v709 = vpop.permute.xlu0 %708
      %710 = vrot.lane.b32.xlu0 %v688, 16
      %v711 = vpop.permute.xlu0 %710
      %712 = vrot.lane.b32.xlu0 %v689, 16
      %v713 = vpop.permute.xlu0 %712
      %v714 = vsel %vm280, %v711, %v713
      %v715 = vsel %vm280, %v709, %v711
      %v716 = vsel %vm280, %v707, %v709
      %v717 = vsel %vm280, %v713, %v707
      %v718 = vmul.f32 %v717, %v288
      %v719 = vmul.f32 %v716, %v292
      %v720 = vmul.f32 %v715, %v296
      %v721 = vmul.f32 %v714, %v300
      %722 = vrot.lane.b32.xlu0 %v686, 15
      %v723 = vpop.permute.xlu0 %722
      %724 = vrot.lane.b32.xlu0 %v687, 15
      %v725 = vpop.permute.xlu0 %724
      %726 = vrot.lane.b32.xlu0 %v688, 15
      %v727 = vpop.permute.xlu0 %726
      %728 = vrot.lane.b32.xlu0 %v689, 15
      %v729 = vpop.permute.xlu0 %728
      %v730 = vsel %vm313, %v727, %v729
      %v731 = vsel %vm313, %v725, %v727
      %v732 = vsel %vm313, %v723, %v725
      %v733 = vsel %vm313, %v729, %v723
      %v734 = vmul.f32 %v733, %v321
      %v735 = vmul.f32 %v732, %v325
      %v736 = vmul.f32 %v731, %v329
      %v737 = vmul.f32 %v730, %v333
      %738 = vrot.lane.b32.xlu0 %v686, 1
      %v739 = vpop.permute.xlu0 %738
      %740 = vrot.lane.b32.xlu0 %v687, 1
      %v741 = vpop.permute.xlu0 %740
      %742 = vrot.lane.b32.xlu0 %v688, 1
      %v743 = vpop.permute.xlu0 %742
      %744 = vrot.lane.b32.xlu0 %v689, 1
      %v745 = vpop.permute.xlu0 %744
      %v746 = vsel %vm346, %v743, %v745
      %v747 = vsel %vm346, %v741, %v743
      %v748 = vsel %vm346, %v739, %v741
      %v749 = vsel %vm346, %v745, %v739
      %v750 = vmul.f32 %v749, %v354
      %v751 = vmul.f32 %v748, %v358
      %v752 = vmul.f32 %v747, %v362
      %v753 = vmul.f32 %v746, %v366
      %v754 = vmul.f32 %v686, %v374
      %v755 = vmul.f32 %v687, %v378
      %v756 = vmul.f32 %v688, %v382
      %v757 = vmul.f32 %v689, %v386
      %758 = vrot.lane.b32.xlu0 %v686, 127
      %v759 = vpop.permute.xlu0 %758
      %760 = vrot.lane.b32.xlu0 %v687, 127
      %v761 = vpop.permute.xlu0 %760
      %762 = vrot.lane.b32.xlu0 %v688, 127
      %v763 = vpop.permute.xlu0 %762
      %764 = vrot.lane.b32.xlu0 %v689, 127
      %v765 = vpop.permute.xlu0 %764
      %v766 = vsel %vm399, %v763, %v765
      %v767 = vsel %vm399, %v761, %v763
      %v768 = vsel %vm399, %v759, %v761
      %v769 = vsel %vm399, %v765, %v759
      %v770 = vmul.f32 %v768, %v407
      %v771 = vmul.f32 %v767, %v411
      %v772 = vmul.f32 %v766, %v415
      %v773 = vmul.f32 %v769, %v419
      %774 = vrot.lane.b32.xlu0 %v686, 113
      %v775 = vpop.permute.xlu0 %774
      %776 = vrot.lane.b32.xlu0 %v687, 113
      %v777 = vpop.permute.xlu0 %776
      %778 = vrot.lane.b32.xlu0 %v688, 113
      %v779 = vpop.permute.xlu0 %778
      %780 = vrot.lane.b32.xlu0 %v689, 113
      %v781 = vpop.permute.xlu0 %780
      %v782 = vsel %vm432, %v779, %v781
      %v783 = vsel %vm432, %v777, %v779
      %v784 = vsel %vm432, %v775, %v777
      %v785 = vsel %vm432, %v781, %v775
      %v786 = vmul.f32 %v784, %v440
      %v787 = vmul.f32 %v783, %v444
      %v788 = vmul.f32 %v782, %v448
      %v789 = vmul.f32 %v785, %v452
      %790 = vrot.lane.b32.xlu0 %v686, 112
      %v791 = vpop.permute.xlu0 %790
      %792 = vrot.lane.b32.xlu0 %v687, 112
      %v793 = vpop.permute.xlu0 %792
      %794 = vrot.lane.b32.xlu0 %v688, 112
      %v795 = vpop.permute.xlu0 %794
      %796 = vrot.lane.b32.xlu0 %v689, 112
      %v797 = vpop.permute.xlu0 %796
      %v798 = vsel %vm465, %v795, %v797
      %v799 = vsel %vm465, %v793, %v795
      %v800 = vsel %vm465, %v791, %v793
      %v801 = vsel %vm465, %v797, %v791
      %v802 = vmul.f32 %v800, %v473
      %v803 = vmul.f32 %v799, %v477
      %v804 = vmul.f32 %v798, %v481
      %v805 = vmul.f32 %v801, %v485
      %806 = vrot.lane.b32.xlu0 %v686, 111
      %v807 = vpop.permute.xlu0 %806
      %808 = vrot.lane.b32.xlu0 %v687, 111
      %v809 = vpop.permute.xlu0 %808
      %810 = vrot.lane.b32.xlu0 %v688, 111
      %v811 = vpop.permute.xlu0 %810
      %812 = vrot.lane.b32.xlu0 %v689, 111
      %v813 = vpop.permute.xlu0 %812
      %v814 = vsel %vm498, %v811, %v813
      %v815 = vsel %vm498, %v809, %v811
      %v816 = vsel %vm498, %v807, %v809
      %v817 = vsel %vm498, %v813, %v807
      %v818 = vmul.f32 %v816, %v506
      %v819 = vmul.f32 %v815, %v510
      %v820 = vmul.f32 %v814, %v514
      %v821 = vmul.f32 %v817, %v518
      %v822 = vld [vmem:[%s3] sm:$0xff]
      %v823 = vld [vmem:[%s4] sm:$0xff]
      %825 = vset.pattern.permute.xlu0 0
      %826 = vperm.xlu0 %825, %v823
      %v827 = vpop.permute.xlu0 %826
      %v830 = vsel %vm525, %v822, 0
      %832 = vmatprep.subr.mxu0 %v703
      %833 = vmatpush1.msra.mxu0 %v702
      %834 = vmatprep.subr.mxu0 %v719
      %835 = vmatpush1.msra.mxu0 %v718
      %836 = vmatprep.subr.mxu0 %v735
      %837 = vmatpush1.msra.mxu0 %v734
      %838 = vmatprep.subr.mxu0 %v751
      %839 = vmatpush1.msra.mxu0 %v750
      %840 = vmatprep.subr.mxu0 %v755
      %841 = vmatpush1.msra.mxu0 %v754
      %842 = vmatprep.subr.mxu0 %v771
      %843 = vmatpush1.msra.mxu0 %v770
      %844 = vmatprep.subr.mxu0 %v787
      %845 = vmatpush1.msra.mxu0 %v786
      %846 = vmatprep.subr.mxu0 %v803
      %847 = vmatpush1.msra.mxu0 %v802
      %848 = vmatprep.subr.mxu0 %v819
      %849 = vmatpush1.msra.mxu0 %v818
      %850 = vmatprep.subr.mxu0 0.0
      %851 = vmatpush1.msra.mxu0 0.0
      %852 = vmatprep.subr.mxu0 0.0
      %853 = vmatpush1.msra.mxu0 0.0
      %854 = vmatprep.subr.mxu0 0.0
      %855 = vmatpush1.msra.mxu0 0.0
      %856 = vmatprep.subr.mxu0 0.0
      %857 = vmatpush1.msra.mxu0 0.0
      %858 = vmatprep.subr.mxu0 0.0
      %859 = vmatpush1.msra.mxu0 0.0
      %860 = vmatprep.subr.mxu0 0.0
      %861 = vmatpush1.msra.mxu0 0.0
      %862 = vmatprep.subr.mxu0 0.0
      %863 = vmatpush1.msra.mxu0 0.0
      %864 = vmatprep.subr.mxu0 0.0
      %865 = vmatpush1.msra.mxu0 0.0
      %866 = vmatprep.subr.mxu0 0.0
      %867 = vmatpush1.msra.mxu0 0.0
      %868 = vmatprep.subr.mxu0 0.0
      %869 = vmatpush1.msra.mxu0 0.0
      %870 = vmatprep.subr.mxu0 0.0
      %871 = vmatpush1.msra.mxu0 0.0
      %872 = vmatprep.subr.mxu0 0.0
      %873 = vmatpush1.msra.mxu0 0.0
      %874 = vmatprep.subr.mxu0 0.0
      %875 = vmatpush1.msra.mxu0 0.0
      %876 = vmatprep.subr.mxu0 0.0
      %877 = vmatpush1.msra.mxu0 0.0
      %878 = vmatprep.subr.mxu0 0.0
      %879 = vmatpush1.msra.mxu0 0.0
      %880 = vmatprep.subr.mxu0 0.0
      %881 = vmatpush1.msra.mxu0 0.0
      %882 = vmatprep.subr.mxu0 0.0
      %883 = vmatpush1.msra.mxu0 0.0
      %884 = vmatprep.subr.mxu0 0.0
      %885 = vmatpush1.msra.mxu0 0.0
      %886 = vmatprep.subr.mxu0 0.0
      %887 = vmatpush1.msra.mxu0 0.0
      %888 = vmatprep.subr.mxu0 0.0
      %889 = vmatpush1.msra.mxu0 0.0
      %890 = vmatprep.subr.mxu0 0.0
      %891 = vmatpush1.msra.mxu0 0.0
      %892 = vmatprep.subr.mxu0 0.0
      %893 = vmatpush1.msra.mxu0 0.0
      %894 = vmatprep.subr.mxu0 0.0
      %895 = vmatpush1.msra.mxu0 0.0
      %896 = vmatprep.mubr.f32.mxu0 0.0
      %897 = vmatmul.mubr.f32.gmra.mrb[0].mxu0 %v830
      %v898 = vpop.f32.mrb[0].mxu0
      %v899 = vadd.f32 %v827, %v898
      %v900 = vpop.f32.mrb[0].mxu0
      %v901 = vadd.f32 %v827, %v900
      %902 = vdwg.mxu0
      %903 = vmatprep.subr.mxu0 %v705
      %904 = vmatpush1.msra.mxu0 %v704
      %905 = vmatprep.subr.mxu0 %v721
      %906 = vmatpush1.msra.mxu0 %v720
      %907 = vmatprep.subr.mxu0 %v737
      %908 = vmatpush1.msra.mxu0 %v736
      %909 = vmatprep.subr.mxu0 %v753
      %910 = vmatpush1.msra.mxu0 %v752
      %911 = vmatprep.subr.mxu0 %v757
      %912 = vmatpush1.msra.mxu0 %v756
      %913 = vmatprep.subr.mxu0 %v773
      %914 = vmatpush1.msra.mxu0 %v772
      %915 = vmatprep.subr.mxu0 %v789
      %916 = vmatpush1.msra.mxu0 %v788
      %917 = vmatprep.subr.mxu0 %v805
      %918 = vmatpush1.msra.mxu0 %v804
      %919 = vmatprep.subr.mxu0 %v821
      %920 = vmatpush1.msra.mxu0 %v820
      %921 = vmatprep.subr.mxu0 0.0
      %922 = vmatpush1.msra.mxu0 0.0
      %923 = vmatprep.subr.mxu0 0.0
      %924 = vmatpush1.msra.mxu0 0.0
      %925 = vmatprep.subr.mxu0 0.0
      %926 = vmatpush1.msra.mxu0 0.0
      %927 = vmatprep.subr.mxu0 0.0
      %928 = vmatpush1.msra.mxu0 0.0
      %929 = vmatprep.subr.mxu0 0.0
      %930 = vmatpush1.msra.mxu0 0.0
      %931 = vmatprep.subr.mxu0 0.0
      %932 = vmatpush1.msra.mxu0 0.0
      %933 = vmatprep.subr.mxu0 0.0
      %934 = vmatpush1.msra.mxu0 0.0
      %935 = vmatprep.subr.mxu0 0.0
      %936 = vmatpush1.msra.mxu0 0.0
      %937 = vmatprep.subr.mxu0 0.0
      %938 = vmatpush1.msra.mxu0 0.0
      %939 = vmatprep.subr.mxu0 0.0
      %940 = vmatpush1.msra.mxu0 0.0
      %941 = vmatprep.subr.mxu0 0.0
      %942 = vmatpush1.msra.mxu0 0.0
      %943 = vmatprep.subr.mxu0 0.0
      %944 = vmatpush1.msra.mxu0 0.0
      %945 = vmatprep.subr.mxu0 0.0
      %946 = vmatpush1.msra.mxu0 0.0
      %947 = vmatprep.subr.mxu0 0.0
      %948 = vmatpush1.msra.mxu0 0.0
      %949 = vmatprep.subr.mxu0 0.0
      %950 = vmatpush1.msra.mxu0 0.0
      %951 = vmatprep.subr.mxu0 0.0
      %952 = vmatpush1.msra.mxu0 0.0
      %953 = vmatprep.subr.mxu0 0.0
      %954 = vmatpush1.msra.mxu0 0.0
      %955 = vmatprep.subr.mxu0 0.0
      %956 = vmatpush1.msra.mxu0 0.0
      %957 = vmatprep.subr.mxu0 0.0
      %958 = vmatpush1.msra.mxu0 0.0
      %959 = vmatprep.subr.mxu0 0.0
      %960 = vmatpush1.msra.mxu0 0.0
      %961 = vmatprep.subr.mxu0 0.0
      %962 = vmatpush1.msra.mxu0 0.0
      %963 = vmatprep.subr.mxu0 0.0
      %964 = vmatpush1.msra.mxu0 0.0
      %965 = vmatprep.subr.mxu0 0.0
      %966 = vmatpush1.msra.mxu0 0.0
      %967 = vmatprep.mubr.f32.mxu0 0.0
      %968 = vmatmul.mubr.f32.gmra.mrb[0].mxu0 %v830
      %v969 = vpop.f32.mrb[0].mxu0
      %v970 = vadd.f32 %v827, %v969
      %v971 = vpop.f32.mrb[0].mxu0
      %v972 = vadd.f32 %v827, %v971
      %973 = vdwg.mxu0
      %v974 = vadd.f32 %v605, %v899
      %v975 = vadd.f32 %v607, %v901
      %v976 = vadd.f32 %v682, %v970
      %v977 = vadd.f32 %v684, %v972
      %978 = vst [vmem:[%s224] sm:$0xff] %v974
      %979 = vst [vmem:[%s224 + $0x8] sm:$0xff] %v975
      %980 = vst [vmem:[%s224 + $0x10] sm:$0xff] %v976
      %981 = vst [vmem:[%s224 + $0x18] sm:$0xff] %v977
      %p982 = scmp.lt.s32.totalorder %s16, 1
      %s983 = scalar_select %p982, %s16, 1
      %s984 = smul.addr %s983, 4
      %s985 = smul.addr %s984, 8
      %s986 = scalar_lea.vmem %s5, %s985
      // Predicated region
      $region41: #{projblock_forward.1} parent=39 // pred_check
        %p987 = pneg %p144
      $region42: #{projblock_forward.1} parent=39 // pred_check_branch
        %989 = sbr.rel (%p987) target = $region44
      $region43: #{projblock_forward.1} parent=39 // pred_region
        _
      $region44: #{projblock_forward.1} parent=39 // pred_fallthru
        _
    $region40: #{projblock_forward.1} parent=5 // pred_fallthru
      _
    %p990 = scmp.le.s32.totalorder 2, %s11
    // Predicated region
    $region45: #{projblock_forward.1} parent=5 // pred_check
      %p991 = pneg %p990
    $region46: #{projblock_forward.1} parent=5 // pred_check_branch
      %993 = sbr.rel (%p991) target = $region48
    $region47: #{projblock_forward.1} parent=5 // pred_region
      %s994 = ssub.s32 %s11, 2
      // Predicated region
      $region49: #{projblock_forward.1} parent=47 // pred_check
        %p995 = pneg %p150
      $region50: #{projblock_forward.1} parent=47 // pred_check_branch
        %997 = sbr.rel (%p995) target = $region52
      $region51: #{projblock_forward.1} parent=47 // pred_region
        %p998 = scmp.lt.s32.totalorder %s17, 1
        %s999 = scalar_select %p998, %s17, 1
        %s1000 = smul.addr %s999, 4
        %s1001 = smul.addr %s1000, 8
        %s1002 = scalar_lea.vmem %s5, %s1001
      $region52: #{projblock_forward.1} parent=47 // pred_fallthru
        _
    $region48: #{projblock_forward.1} parent=5 // pred_fallthru
      _
  $region6: #{projblock_forward.1} parent=0 // loop_footer
    %s15 = sadd.s32 1, %s11
  $region7: #{projblock_forward.1} parent=0 // loop_footer_branch
    %10 = sbr.rel target = $region3
  $region8: #{projblock_forward.1} parent=0 // loop_exit
    _

</llo_original>
